<compile_context>
chip_gen: v6e
topology: v6e:2x2x1
jax: 0.10.0
libtpu: 0.0.40
codegen_flags: <defaults>
</compile_context>

<pallas_src>
import functools

import jax
import jax.numpy as jnp
from jax import lax
from jax.experimental import pallas as pl
from jax.experimental.pallas import tpu as pltpu

LANES = 128
SUBLANES = 8
BLOCK_ROWS_MAX = 8192                   # (8192, 128) f32 = 4 MiB / input / step
VMEM_LIMIT_BYTES = 48 * 1024 * 1024     # fits v7x's 64 MiB physical with headroom


def _sigmoid(x):
    # sigmoid(x) == 0.5 * (1 + tanh(x / 2)): one EUP transcendental + 2 VPU ops
    # instead of exp + exact divide.
    return 0.5 * (jnp.tanh(0.5 * x) + 1.0)


def _accumulate(p_ref, t_ref, acc_ref, *, steps, mask_fn=None):
    """Fold `steps` (8, 128) sub-slabs of p/t into the 3-row accumulator.

    Single pass: each sub-slab is loaded once, sigmoid computed once, and all
    three partial sums updated in vregs (no full-block intermediates in VMEM).
    """
    def body(i, carry):
        acc_i, acc_p, acc_t = carry
        r0 = pl.multiple_of(i * SUBLANES, SUBLANES)
        p = _sigmoid(p_ref[pl.ds(r0, SUBLANES), :].astype(jnp.float32))
        t = t_ref[pl.ds(r0, SUBLANES), :].astype(jnp.float32)
        if mask_fn is not None:
            m = mask_fn(i)
            p = jnp.where(m, p, 0.0)
            t = jnp.where(m, t, 0.0)
        return acc_i + p * t, acc_p + p, acc_t + t

    init = (acc_ref[0], acc_ref[1], acc_ref[2])
    acc_i, acc_p, acc_t = lax.fori_loop(0, steps, body, init,
                                        unroll=min(8, steps))
    acc_ref[0] = acc_i
    acc_ref[1] = acc_p
    acc_ref[2] = acc_t


def _dice_kernel(p_ref, t_ref, out_ref, acc_ref, *,
                 full_blocks, rem, block_rows, inner_steps):
    c = pl.program_id(0)   # "parallel" split (one TensorCore each on v7x)
    j = pl.program_id(1)   # "arbitrary" reduction axis

    @pl.when(j == 0)
    def _():
        acc_ref[...] = jnp.zeros_like(acc_ref)

    blk = c * inner_steps + j   # block-unit index: no int32 overflow risk

    # Fast path: block fully covered by valid elements -> no per-element mask.
    @pl.when(blk < full_blocks)
    def _():
        _accumulate(p_ref, t_ref, acc_ref, steps=block_rows // SUBLANES)

    # Slow path: only the single static tail block (rem > 0).  Phantom blocks
    # (blk >= number of real blocks) contribute nothing and do no compute.
    # rem < block_rows * 128 <= 2**20, so int32 local indexing is exact.
    if rem > 0:
        masked_rows = (rem + LANES - 1) // LANES
        masked_steps = (masked_rows + SUBLANES - 1) // SUBLANES

        if rem % LANES == 0:
            valid_rows = rem // LANES

            def mask_fn(i):
                row = i * SUBLANES + lax.broadcasted_iota(
                    jnp.int32, (SUBLANES, LANES), 0)
                return row < valid_rows
        else:
            def mask_fn(i):
                row = i * SUBLANES + lax.broadcasted_iota(
                    jnp.int32, (SUBLANES, LANES), 0)
                lane = lax.broadcasted_iota(jnp.int32, (SUBLANES, LANES), 1)
                return row * LANES + lane < rem

        @pl.when(blk == full_blocks)
        def _():
            _accumulate(p_ref, t_ref, acc_ref, steps=masked_steps,
                        mask_fn=mask_fn)

    # One cross-lane reduction + SMEM write per split.
    @pl.when(j == pl.num_programs(1) - 1)
    def _():
        out_ref[0, 0] = jnp.sum(acc_ref[0])   # sum(sigmoid(p) * t) partial
        out_ref[0, 1] = jnp.sum(acc_ref[1])   # sum(sigmoid(p)) partial
        out_ref[0, 2] = jnp.sum(acc_ref[2])   # sum(t) partial


def _num_tensorcores():
    """Best-effort TensorCore count; falls back to 1 (safe) if unknown."""
    try:
        info = pltpu.get_tpu_info()
        for name in ("num_cores", "core_count", "num_tensorcores",
                     "tensorcores_per_chip", "cores_per_chip"):
            v = getattr(info, name, None)
            if isinstance(v, int) and v > 0:
                return v
    except Exception:
        pass
    return 1


def dice_loss(predictions, targets, smooth=1e-07):
    """Pallas DiceLoss.forward.  Returns a scalar f32.

    Inputs are consumed in their native dtype; pass bf16 predictions/targets
    to halve HBM traffic on the memory-bound path (do not upcast beforehand).
    """
    p_flat = predictions.reshape(-1)
    t_flat = targets.reshape(-1)
    n = p_flat.shape[0]

    chunk = SUBLANES * LANES
    # Pad (< 1024 elements) only when the flat length cannot be viewed as a
    # lane-dense (rows, 128) slab with rows >= 8; padding is masked in-kernel.
    if n % LANES != 0 or n < chunk:
        total = ((n + chunk - 1) // chunk) * chunk
        pad = total - n
        p_flat = jnp.pad(p_flat, (0, pad))
        t_flat = jnp.pad(t_flat, (0, pad))
    else:
        total = n

    rows = total // LANES
    p2d = p_flat.reshape(rows, LANES)
    t2d = t_flat.reshape(rows, LANES)

    block_rows = min(BLOCK_ROWS_MAX, (rows // SUBLANES) * SUBLANES)
    block_elems = block_rows * LANES
    blocks_total = pl.cdiv(rows, block_rows)
    full_blocks = n // block_elems          # blocks fully covered by valid data
    rem = n - full_blocks * block_elems     # valid elements in the tail block

    # One split per TensorCore, but never waste phantom-block DMA on
    # single-core chips or tiny inputs.
    splits = 2 if (_num_tensorcores() >= 2 and blocks_total >= 2) else 1
    inner_steps = pl.cdiv(blocks_total, splits)

    def in_map(c, j):
        # Clamp phantom blocks onto a valid one; the kernel skips their compute.
        return (jnp.minimum(c * inner_steps + j, blocks_total - 1), 0)

    partials = pl.pallas_call(
        functools.partial(_dice_kernel, full_blocks=full_blocks, rem=rem,
                          block_rows=block_rows, inner_steps=inner_steps),
        out_shape=jax.ShapeDtypeStruct((splits, 3), jnp.float32),
        grid_spec=pltpu.PrefetchScalarGridSpec(
            num_scalar_prefetch=0,
            grid=(splits, inner_steps),
            in_specs=[
                pl.BlockSpec((block_rows, LANES), in_map),
                pl.BlockSpec((block_rows, LANES), in_map),
            ],
            out_specs=pl.BlockSpec((1, 3), lambda c, j: (c, 0),
                                   memory_space=pltpu.MemorySpace.SMEM),
            scratch_shapes=[pltpu.VMEM((3, SUBLANES, LANES), jnp.float32)],
        ),
        compiler_params=pltpu.CompilerParams(
            dimension_semantics=("parallel", "arbitrary"),
            vmem_limit_bytes=VMEM_LIMIT_BYTES,
        ),
    )(p2d, t2d)

    intersection = jnp.sum(partials[:, 0])
    psum = jnp.sum(partials[:, 1])
    tsum = jnp.sum(partials[:, 2])
    dice = (2.0 * intersection + smooth) / (psum + tsum + smooth)
    return 1.0 - dice


def dice_loss_ref(predictions, targets, smooth=1e-07):
    p = jax.nn.sigmoid(predictions.astype(jnp.float32)).reshape(-1)
    t = targets.astype(jnp.float32).reshape(-1)
    inter = jnp.sum(p * t)
    dice = (2.0 * inter + smooth) / (jnp.sum(p) + jnp.sum(t) + smooth)
    return 1.0 - dice


if __name__ == "__main__":
    key = jax.random.PRNGKey(0)
    kp, kt = jax.random.split(key)
    # Same shape convention as the PyTorch module's typical use: NCHW logits
    # and binary targets.
    preds = jax.random.normal(kp, (2, 4, 16, 16), dtype=jnp.float32)
    targs = (jax.random.uniform(kt, (2, 4, 16, 16)) > 0.5).astype(jnp.float32)

    loss = dice_loss(preds, targs)
    jax.block_until_ready(loss)

    ref = dice_loss_ref(preds, targs)
    assert jnp.allclose(loss, ref, atol=1e-5, rtol=1e-5), (loss, ref)
    print("KERNEL_OK")
</pallas_src>

<mosaic_0001>
module attributes {stable_mosaic.version = 11 : i64} {
  func.func @_dice_kernel(%arg0: i32, %arg1: i32, %arg2: memref<16x128xf32, #tpu.memory_space<vmem>>, %arg3: memref<16x128xf32, #tpu.memory_space<vmem>>, %arg4: memref<1x3xf32, #tpu.memory_space<smem>>, %arg5: memref<3x8x128xf32, #tpu.memory_space<vmem>>) attributes {dimension_semantics = [#tpu.dimension_semantics<parallel>, #tpu.dimension_semantics<arbitrary>], iteration_bounds = array<i64: 1, 1>, scalar_prefetch = 0 : i64, scratch_operands = 1 : i64, tpu.core_type = #tpu.core_type<tc>, window_params = [{transform_indices = @transform_0, window_bounds = array<i64: 16, 128>}, {transform_indices = @transform_1, window_bounds = array<i64: 16, 128>}, {transform_indices = @transform_2, window_bounds = array<i64: 1, 3>}]} {
    %c0_i32 = arith.constant 0 : i32
    %0 = arith.cmpi eq, %arg1, %c0_i32 : i32
    %1 = arith.extui %0 : i1 to i32
    %c0_i32_0 = arith.constant 0 : i32
    %2 = arith.cmpi ne, %1, %c0_i32_0 : i32
    scf.if %2 {
      %cst = arith.constant 0.000000e+00 : f32
      %11 = vector.broadcast %cst : f32 to vector<3x8x128xf32>
      %c0 = arith.constant 0 : index
      %c0_5 = arith.constant 0 : index
      %c0_6 = arith.constant 0 : index
      %12 = vector.load %arg5[%c0, %c0_5, %c0_6] : memref<3x8x128xf32, #tpu.memory_space<vmem>>, vector<3x8x128xf32>
      tpu.vector_store %arg5[%c0, %c0_5, %c0_6], %11 {strides = array<i32>} : memref<3x8x128xf32, #tpu.memory_space<vmem>>, vector<3x8x128xf32>,
    } else {
    }
    %c1_i32 = arith.constant 1 : i32
    %3 = arith.muli %arg0, %c1_i32 : i32
    %4 = arith.addi %3, %arg1 : i32
    %c1_i32_1 = arith.constant 1 : i32
    %5 = arith.cmpi slt, %4, %c1_i32_1 : i32
    %6 = arith.extui %5 : i1 to i32
    %c0_i32_2 = arith.constant 0 : i32
    %7 = arith.cmpi ne, %6, %c0_i32_2 : i32
    scf.if %7 {
      %c0 = arith.constant 0 : index
      %c0_5 = arith.constant 0 : index
      %c0_6 = arith.constant 0 : index
      %11 = vector.load %arg5[%c0, %c0_5, %c0_6] : memref<3x8x128xf32, #tpu.memory_space<vmem>>, vector<1x8x128xf32>
      %12 = vector.shape_cast %11 : vector<1x8x128xf32> to vector<8x128xf32>
      %c1 = arith.constant 1 : index
      %c0_7 = arith.constant 0 : index
      %c0_8 = arith.constant 0 : index
      %13 = vector.load %arg5[%c1, %c0_7, %c0_8] : memref<3x8x128xf32, #tpu.memory_space<vmem>>, vector<1x8x128xf32>
      %14 = vector.shape_cast %13 : vector<1x8x128xf32> to vector<8x128xf32>
      %c2 = arith.constant 2 : index
      %c0_9 = arith.constant 0 : index
      %c0_10 = arith.constant 0 : index
      %15 = vector.load %arg5[%c2, %c0_9, %c0_10] : memref<3x8x128xf32, #tpu.memory_space<vmem>>, vector<1x8x128xf32>
      %16 = vector.shape_cast %15 : vector<1x8x128xf32> to vector<8x128xf32>
      %c0_i32_11 = arith.constant 0 : i32
      %c8_i32 = arith.constant 8 : i32
      %17 = arith.muli %c0_i32_11, %c8_i32 : i32
      %18 = tpu.assume_multiple %17, 8 : i32
      %19 = arith.index_cast %18 : i32 to index
      %c0_12 = arith.constant 0 : index
      %20 = vector.load %arg2[%19, %c0_12] : memref<16x128xf32, #tpu.memory_space<vmem>>, vector<8x128xf32>
      %cst = arith.constant 5.000000e-01 : f32
      %21 = vector.broadcast %cst : f32 to vector<8x128xf32>
      %22 = arith.mulf %21, %20 : vector<8x128xf32>
      %23 = math.tanh %22 : vector<8x128xf32>
      %cst_13 = arith.constant 1.000000e+00 : f32
      %24 = vector.broadcast %cst_13 : f32 to vector<8x128xf32>
      %25 = arith.addf %23, %24 : vector<8x128xf32>
      %cst_14 = arith.constant 5.000000e-01 : f32
      %26 = vector.broadcast %cst_14 : f32 to vector<8x128xf32>
      %27 = arith.mulf %26, %25 : vector<8x128xf32>
      %28 = arith.index_cast %18 : i32 to index
      %c0_15 = arith.constant 0 : index
      %29 = vector.load %arg3[%28, %c0_15] : memref<16x128xf32, #tpu.memory_space<vmem>>, vector<8x128xf32>
      %30 = arith.mulf %27, %29 : vector<8x128xf32>
      %31 = arith.addf %12, %30 : vector<8x128xf32>
      %32 = arith.addf %14, %27 : vector<8x128xf32>
      %33 = arith.addf %16, %29 : vector<8x128xf32>
      %c1_i32_16 = arith.constant 1 : i32
      %c8_i32_17 = arith.constant 8 : i32
      %34 = arith.muli %c1_i32_16, %c8_i32_17 : i32
      %35 = tpu.assume_multiple %34, 8 : i32
      %36 = arith.index_cast %35 : i32 to index
      %c0_18 = arith.constant 0 : index
      %37 = vector.load %arg2[%36, %c0_18] : memref<16x128xf32, #tpu.memory_space<vmem>>, vector<8x128xf32>
      %cst_19 = arith.constant 5.000000e-01 : f32
      %38 = vector.broadcast %cst_19 : f32 to vector<8x128xf32>
      %39 = arith.mulf %38, %37 : vector<8x128xf32>
      %40 = math.tanh %39 : vector<8x128xf32>
      %cst_20 = arith.constant 1.000000e+00 : f32
      %41 = vector.broadcast %cst_20 : f32 to vector<8x128xf32>
      %42 = arith.addf %40, %41 : vector<8x128xf32>
      %cst_21 = arith.constant 5.000000e-01 : f32
      %43 = vector.broadcast %cst_21 : f32 to vector<8x128xf32>
      %44 = arith.mulf %43, %42 : vector<8x128xf32>
      %45 = arith.index_cast %35 : i32 to index
      %c0_22 = arith.constant 0 : index
      %46 = vector.load %arg3[%45, %c0_22] : memref<16x128xf32, #tpu.memory_space<vmem>>, vector<8x128xf32>
      %47 = arith.mulf %44, %46 : vector<8x128xf32>
      %48 = arith.addf %31, %47 : vector<8x128xf32>
      %49 = arith.addf %32, %44 : vector<8x128xf32>
      %50 = arith.addf %33, %46 : vector<8x128xf32>
      %c2_i32 = arith.constant 2 : i32
      %c0_23 = arith.constant 0 : index
      %c0_24 = arith.constant 0 : index
      %c0_25 = arith.constant 0 : index
      %51 = vector.load %arg5[%c0_23, %c0_24, %c0_25] : memref<3x8x128xf32, #tpu.memory_space<vmem>>, vector<1x8x128xf32>
      %52 = vector.shape_cast %51 : vector<1x8x128xf32> to vector<8x128xf32>
      %53 = vector.shape_cast %48 : vector<8x128xf32> to vector<1x8x128xf32>
      tpu.vector_store %arg5[%c0_23, %c0_24, %c0_25], %53 {strides = array<i32>} : memref<3x8x128xf32, #tpu.memory_space<vmem>>, vector<1x8x128xf32>,
      %c1_26 = arith.constant 1 : index
      %c0_27 = arith.constant 0 : index
      %c0_28 = arith.constant 0 : index
      %54 = vector.load %arg5[%c1_26, %c0_27, %c0_28] : memref<3x8x128xf32, #tpu.memory_space<vmem>>, vector<1x8x128xf32>
      %55 = vector.shape_cast %54 : vector<1x8x128xf32> to vector<8x128xf32>
      %56 = vector.shape_cast %49 : vector<8x128xf32> to vector<1x8x128xf32>
      tpu.vector_store %arg5[%c1_26, %c0_27, %c0_28], %56 {strides = array<i32>} : memref<3x8x128xf32, #tpu.memory_space<vmem>>, vector<1x8x128xf32>,
      %c2_29 = arith.constant 2 : index
      %c0_30 = arith.constant 0 : index
      %c0_31 = arith.constant 0 : index
      %57 = vector.load %arg5[%c2_29, %c0_30, %c0_31] : memref<3x8x128xf32, #tpu.memory_space<vmem>>, vector<1x8x128xf32>
      %58 = vector.shape_cast %57 : vector<1x8x128xf32> to vector<8x128xf32>
      %59 = vector.shape_cast %50 : vector<8x128xf32> to vector<1x8x128xf32>
      tpu.vector_store %arg5[%c2_29, %c0_30, %c0_31], %59 {strides = array<i32>} : memref<3x8x128xf32, #tpu.memory_space<vmem>>, vector<1x8x128xf32>,
    } else {
    }
    %c0_i32_3 = arith.constant 0 : i32
    %8 = arith.cmpi eq, %arg1, %c0_i32_3 : i32
    %9 = arith.extui %8 : i1 to i32
    %c0_i32_4 = arith.constant 0 : i32
    %10 = arith.cmpi ne, %9, %c0_i32_4 : i32
    scf.if %10 {
      %c0 = arith.constant 0 : index
      %c0_5 = arith.constant 0 : index
      %c0_6 = arith.constant 0 : index
      %11 = vector.load %arg5[%c0, %c0_5, %c0_6] : memref<3x8x128xf32, #tpu.memory_space<vmem>>, vector<1x8x128xf32>
      %12 = vector.shape_cast %11 : vector<1x8x128xf32> to vector<8x128xf32>
      %13 = vector.shape_cast %12 : vector<8x128xf32> to vector<1x8x128xf32>
      %cst = arith.constant dense<0.000000e+00> : vector<1xf32>
      %14 = vector.multi_reduction <add>, %13, %cst [1, 2] : vector<1x8x128xf32> to vector<1xf32>
      %15 = vector.shape_cast %14 : vector<1xf32> to vector<1x1x1xf32>
      %16 = vector.extract %15[0, 0, 0] : f32 from vector<1x1x1xf32>
      %c0_7 = arith.constant 0 : index
      %c0_8 = arith.constant 0 : index
      %17 = memref.load %arg4[%c0_7, %c0_8] : memref<1x3xf32, #tpu.memory_space<smem>>
      memref.store %16, %arg4[%c0_7, %c0_8] : memref<1x3xf32, #tpu.memory_space<smem>>
      %c1 = arith.constant 1 : index
      %c0_9 = arith.constant 0 : index
      %c0_10 = arith.constant 0 : index
      %18 = vector.load %arg5[%c1, %c0_9, %c0_10] : memref<3x8x128xf32, #tpu.memory_space<vmem>>, vector<1x8x128xf32>
      %19 = vector.shape_cast %18 : vector<1x8x128xf32> to vector<8x128xf32>
      %20 = vector.shape_cast %19 : vector<8x128xf32> to vector<1x8x128xf32>
      %cst_11 = arith.constant dense<0.000000e+00> : vector<1xf32>
      %21 = vector.multi_reduction <add>, %20, %cst_11 [1, 2] : vector<1x8x128xf32> to vector<1xf32>
      %22 = vector.shape_cast %21 : vector<1xf32> to vector<1x1x1xf32>
      %23 = vector.extract %22[0, 0, 0] : f32 from vector<1x1x1xf32>
      %c0_12 = arith.constant 0 : index
      %c1_13 = arith.constant 1 : index
      %24 = memref.load %arg4[%c0_12, %c1_13] : memref<1x3xf32, #tpu.memory_space<smem>>
      memref.store %23, %arg4[%c0_12, %c1_13] : memref<1x3xf32, #tpu.memory_space<smem>>
      %c2 = arith.constant 2 : index
      %c0_14 = arith.constant 0 : index
      %c0_15 = arith.constant 0 : index
      %25 = vector.load %arg5[%c2, %c0_14, %c0_15] : memref<3x8x128xf32, #tpu.memory_space<vmem>>, vector<1x8x128xf32>
      %26 = vector.shape_cast %25 : vector<1x8x128xf32> to vector<8x128xf32>
      %27 = vector.shape_cast %26 : vector<8x128xf32> to vector<1x8x128xf32>
      %cst_16 = arith.constant dense<0.000000e+00> : vector<1xf32>
      %28 = vector.multi_reduction <add>, %27, %cst_16 [1, 2] : vector<1x8x128xf32> to vector<1xf32>
      %29 = vector.shape_cast %28 : vector<1xf32> to vector<1x1x1xf32>
      %30 = vector.extract %29[0, 0, 0] : f32 from vector<1x1x1xf32>
      %c0_17 = arith.constant 0 : index
      %c2_18 = arith.constant 2 : index
      %31 = memref.load %arg4[%c0_17, %c2_18] : memref<1x3xf32, #tpu.memory_space<smem>>
      memref.store %30, %arg4[%c0_17, %c2_18] : memref<1x3xf32, #tpu.memory_space<smem>>
    } else {
    }
    return
  }
  func.func @transform_0(%arg0: i32, %arg1: i32) -> (i32, i32) {
    %c1_i32 = arith.constant 1 : i32
    %0 = arith.muli %arg0, %c1_i32 : i32
    %1 = arith.addi %0, %arg1 : i32
    %c0_i32 = arith.constant 0 : i32
    %2 = arith.minsi %1, %c0_i32 : i32
    %c0_i32_0 = arith.constant 0 : i32
    %c0_i32_1 = arith.constant 0 : i32
    return %2, %c0_i32_0 : i32, i32
  }
  func.func @transform_1(%arg0: i32, %arg1: i32) -> (i32, i32) {
    %c1_i32 = arith.constant 1 : i32
    %0 = arith.muli %arg0, %c1_i32 : i32
    %1 = arith.addi %0, %arg1 : i32
    %c0_i32 = arith.constant 0 : i32
    %2 = arith.minsi %1, %c0_i32 : i32
    %c0_i32_0 = arith.constant 0 : i32
    %c0_i32_1 = arith.constant 0 : i32
    return %2, %c0_i32_0 : i32, i32
  }
  func.func @transform_2(%arg0: i32, %arg1: i32) -> (i32, i32) {
    %c0_i32 = arith.constant 0 : i32
    %c0_i32_0 = arith.constant 0 : i32
    return %arg0, %c0_i32 : i32, i32
  }
}

</mosaic_0001>

<llo_original>
// kernel: tpu_custom_call.1
$region0: #{tpu_custom_call.1}
  #allocation0 [shape = 'u32[]', space=smem, size = 0x4, offset = 0x4, fixed_abs, tag = 'smem constant byte address 0x4 - core index']
  #allocation1 [shape = 'u32[144,128]{1,0:T(1,128)}', space=vmem, size = 0x12000, scoped, tag = 'internal scratch']
  #allocation2 [shape = 'f32[3,8,128]{2,1,0:T(8,128)}', space=vmem, size = 0x3000, scoped, tag = 'scratch operand']
  %s0 = inlined_call_operand.hbm [shape: f32[16,128], index: 0, kind: input, shape index: {}]
  %s1 = inlined_call_operand.hbm [shape: f32[16,128], index: 1, kind: input, shape index: {}]
  %s2 = inlined_call_operand.hbm [shape: f32[1,3], index: 2, kind: output, shape index: {}]
  %s3 = sld [smem:[#allocation0]]
  $region38: #{tpu_custom_call.1} parent=0
    _
  %s5 = ssub.s32 1, %s3
  %s6 = scalar_select 0, %s5, %s3
  $region1: #{tpu_custom_call.1} parent=0
    #allocation3 [shape = 'u8[8192]{0}', space=vmem, size = 0x2000, scoped, tag = 'input window, operand 0, single buffered']
    #allocation4 [shape = 's32[1]{0}', space=sflag, size = 0x4, scoped, tag = 'scoped memory for tpu_custom_call.1']
    #allocation5 [shape = 's32[1]{0}', space=sflag, size = 0x4, scoped, tag = 'scoped memory for tpu_custom_call.1']
    #allocation6 [shape = 'u8[8192]{0}', space=vmem, size = 0x2000, scoped, tag = 'input window, operand 1, single buffered']
    #allocation7 [shape = 's32[1]{0}', space=sflag, size = 0x4, scoped, tag = 'scoped memory for tpu_custom_call.1']
    #allocation8 [shape = 'u8[512]{0}', space=smem, size = 0x200, scoped, tag = 'output window, operand 0, single buffered']
    %7 = vsyncpa [#allocation4], 0
    %8 = vsyncpa [#allocation7], 0
    %9 = vsyncpa [#allocation5], 0
    // Predicated region
    $region2: #{tpu_custom_call.1} parent=1 // pred_check
      _
    $region3: #{tpu_custom_call.1} parent=1 // pred_check_branch
      %11 = sbr.rel (0) target = $region5
    $region4: #{tpu_custom_call.1} parent=1 // pred_region
      %s12 = sadd.s32 0, 0
      %p13 = scmp.lt.s32.totalorder %s12, 0
      %s14 = scalar_select %p13, %s12, 0
      %s15 = smul.u32 2, %s14
      %s17 = ssub.s32 256, 256
      %18 = vsyncadd [#allocation4], %s17
      %s19 = smul.addr %s15, 128
      %s20 = scalar_lea.hbm %s0, %s19
      %s21 = sshll.u32 [#allocation3], 4
      %s22 = int_to_ptr.vmem [resolvable:$true] %s21
      %27 = dma.hbm_to_vmem [thread:$0]  %s20, 256, %s22, [#allocation4], 128, 128, 8
    $region5: #{tpu_custom_call.1} parent=1 // pred_fallthru
      _
    // Predicated region
    $region6: #{tpu_custom_call.1} parent=1 // pred_check
      _
    $region7: #{tpu_custom_call.1} parent=1 // pred_check_branch
      %29 = sbr.rel (0) target = $region9
    $region8: #{tpu_custom_call.1} parent=1 // pred_region
      %s30 = sadd.s32 0, 0
      %p31 = scmp.lt.s32.totalorder %s30, 0
      %s32 = scalar_select %p31, %s30, 0
      %s33 = smul.u32 2, %s32
      %s35 = ssub.s32 256, 256
      %36 = vsyncadd [#allocation7], %s35
      %s37 = smul.addr %s33, 128
      %s38 = scalar_lea.hbm %s1, %s37
      %s39 = sshll.u32 [#allocation6], 4
      %s40 = int_to_ptr.vmem [resolvable:$true] %s39
      %45 = dma.hbm_to_vmem [thread:$0]  %s38, 256, %s40, [#allocation7], 128, 128, 8
    $region9: #{tpu_custom_call.1} parent=1 // pred_fallthru
      _
    // Predicated region
    $region10: #{tpu_custom_call.1} parent=1 // pred_check
      _
    $region11: #{tpu_custom_call.1} parent=1 // pred_check_branch
      %47 = sbr.rel (0) target = $region13
    $region12: #{tpu_custom_call.1} parent=1 // pred_region
      %48 = dma.done [#allocation4], 256
    $region13: #{tpu_custom_call.1} parent=1 // pred_fallthru
      _
    // Predicated region
    $region14: #{tpu_custom_call.1} parent=1 // pred_check
      _
    $region15: #{tpu_custom_call.1} parent=1 // pred_check_branch
      %50 = sbr.rel (0) target = $region17
    $region16: #{tpu_custom_call.1} parent=1 // pred_region
      %51 = dma.done [#allocation7], 256
    $region17: #{tpu_custom_call.1} parent=1 // pred_fallthru
      _
    %s52 = sadd.s32 0, 0
    %p53 = scmp.lt.s32.totalorder %s52, 0
    %s54 = scalar_select %p53, %s52, 0
    %s55 = smul.u32 2, %s54
    %s56 = sadd.s32 0, 0
    %p57 = scmp.lt.s32.totalorder %s56, 0
    %s58 = scalar_select %p57, %s56, 0
    %s59 = smul.u32 2, %s58
    %p60 = scmp.eq.s32.totalorder 0, 0
    // Predicated region
    $region18: #{tpu_custom_call.1} parent=1 // pred_check
      %p61 = pneg %p60
    $region19: #{tpu_custom_call.1} parent=1 // pred_check_branch
      %63 = sbr.rel (%p61) target = $region21
    $region20: #{tpu_custom_call.1} parent=1 // pred_region
      %64 = vst [vmem:[#allocation2] sm:$0xff] 0.0
      %65 = vst [vmem:[#allocation2 + $0x8] sm:$0xff] 0.0
      %66 = vst [vmem:[#allocation2 + $0x10] sm:$0xff] 0.0
    $region21: #{tpu_custom_call.1} parent=1 // pred_fallthru
      _
    %s67 = sadd.s32 0, 0
    %p68 = scmp.lt.s32.totalorder %s67, 1
    // Predicated region
    $region22: #{tpu_custom_call.1} parent=1 // pred_check
      %p69 = pneg %p68
    $region23: #{tpu_custom_call.1} parent=1 // pred_check_branch
      %71 = sbr.rel (%p69) target = $region25
    $region24: #{tpu_custom_call.1} parent=1 // pred_region
      %v72 = vld [vmem:[#allocation2] sm:$0xff]
      %s73 = scalar_lea.vmem [#allocation2], 8
      %v74 = vld [vmem:[%s73] sm:$0xff]
      %s75 = scalar_lea.vmem [#allocation2], 16
      %v76 = vld [vmem:[%s75] sm:$0xff]
      %v77 = vld [vmem:[#allocation3] sm:$0xff]
      %v78 = vmul.f32 %v77, 0.5
      %v79 = vtanh.pop %v78
      %v80 = vadd.f32 %v79, 1.0
      %v81 = vmul.f32 %v80, 0.5
      %v82 = vld [vmem:[#allocation6] sm:$0xff]
      %v83 = vmul.f32 %v81, %v82
      %v84 = vadd.f32 %v72, %v83
      %v85 = vadd.f32 %v74, %v81
      %v86 = vadd.f32 %v76, %v82
      %s87 = scalar_lea.vmem [#allocation3], 8
      %v88 = vld [vmem:[%s87] sm:$0xff]
      %v89 = vmul.f32 %v88, 0.5
      %v90 = vtanh.pop %v89
      %v91 = vadd.f32 %v90, 1.0
      %v92 = vmul.f32 %v91, 0.5
      %s93 = scalar_lea.vmem [#allocation6], 8
      %v94 = vld [vmem:[%s93] sm:$0xff]
      %v95 = vmul.f32 %v92, %v94
      %v96 = vadd.f32 %v84, %v95
      %v97 = vadd.f32 %v85, %v92
      %v98 = vadd.f32 %v86, %v94
      %99 = vst [vmem:[#allocation2] sm:$0xff] %v96
      %100 = vst [vmem:[%s73] sm:$0xff] %v97
      %101 = vst [vmem:[%s75] sm:$0xff] %v98
    $region25: #{tpu_custom_call.1} parent=1 // pred_fallthru
      _
    // Predicated region
    $region26: #{tpu_custom_call.1} parent=1 // pred_check
      %p102 = pneg %p60
    $region27: #{tpu_custom_call.1} parent=1 // pred_check_branch
      %104 = sbr.rel (%p102) target = $region29
    $region28: #{tpu_custom_call.1} parent=1 // pred_region
      %v105 = vld [vmem:[#allocation2] sm:$0xff]
      %106 = vadd.xlane.f32.xlu0 %v105
      %v107 = vpop.xlane.xlu0 %106
      %v108 = vrot.slane %v107, 4
      %v109 = vadd.f32 %v107, %v108
      %v110 = vrot.slane %v109, 2
      %v111 = vadd.f32 %v109, %v110
      %v112 = vrot.slane %v111, 1
      %v113 = vadd.f32 %v111, %v112
      %s114 = vtos %v113
      %s115 = scalar_lea.smem [#allocation8], 0
      %116 = sst [smem:[%s115]] %s114
      %s117 = scalar_lea.vmem [#allocation2], 8
      %v118 = vld [vmem:[%s117] sm:$0xff]
      %119 = vadd.xlane.f32.xlu0 %v118
      %v120 = vpop.xlane.xlu0 %119
      %v121 = vrot.slane %v120, 4
      %v122 = vadd.f32 %v120, %v121
      %v123 = vrot.slane %v122, 2
      %v124 = vadd.f32 %v122, %v123
      %v125 = vrot.slane %v124, 1
      %v126 = vadd.f32 %v124, %v125
      %s127 = vtos %v126
      %s128 = scalar_lea.smem [#allocation8], 1
      %129 = sst [smem:[%s128]] %s127
      %s130 = scalar_lea.vmem [#allocation2], 16
      %v131 = vld [vmem:[%s130] sm:$0xff]
      %132 = vadd.xlane.f32.xlu0 %v131
      %v133 = vpop.xlane.xlu0 %132
      %v134 = vrot.slane %v133, 4
      %v135 = vadd.f32 %v133, %v134
      %v136 = vrot.slane %v135, 2
      %v137 = vadd.f32 %v135, %v136
      %v138 = vrot.slane %v137, 1
      %v139 = vadd.f32 %v137, %v138
      %s140 = vtos %v139
      %s141 = scalar_lea.smem [#allocation8], 2
      %142 = sst [smem:[%s141]] %s140
    $region29: #{tpu_custom_call.1} parent=1 // pred_fallthru
      _
    // Predicated region
    $region30: #{tpu_custom_call.1} parent=1 // pred_check
      _
    $region31: #{tpu_custom_call.1} parent=1 // pred_check_branch
      %144 = sbr.rel (0) target = $region33
    $region32: #{tpu_custom_call.1} parent=1 // pred_region
      %s146 = ssub.s32 16, 16
      %147 = vsyncadd [#allocation5], %s146
      %150 = dma.smem_to_hbm [#allocation8], 16, %s2, [#allocation5]
    $region33: #{tpu_custom_call.1} parent=1 // pred_fallthru
      _
    // Predicated region
    $region34: #{tpu_custom_call.1} parent=1 // pred_check
      _
    $region35: #{tpu_custom_call.1} parent=1 // pred_check_branch
      %152 = sbr.rel (0) target = $region37
    $region36: #{tpu_custom_call.1} parent=1 // pred_region
      %153 = dma.done [#allocation5], 16
    $region37: #{tpu_custom_call.1} parent=1 // pred_fallthru
      _
    %154 = sfence
    %155 = vsyncpa [#allocation4], 1
    %156 = vsyncpa [#allocation7], 1
    %157 = vsyncpa [#allocation5], 1

</llo_original>
